<compile_context>
chip_gen: v6e
topology: v6e:2x2x1
jax: 0.10.0
libtpu: 0.0.40
codegen_flags: <defaults>
</compile_context>

<pallas_src>
import jax
import jax.numpy as jnp
from jax import lax
from jax.experimental import pallas as pl
from jax.experimental.pallas import tpu as pltpu

NUM_STATE = 4      # CartPole-v0 observation dim
HIDDEN = 100       # fc1 width
NUM_ACTION = 2     # CartPole-v0 action dim
HPAD = 128         # hidden padded to one lane width; lane 127 = constant-1 bias lane
TILE_B = 4096      # batch rows per grid step (multiple of STRIP)
STRIP = 128        # rows per in-kernel sub-strip (16 vregs of h -> stays in registers)


def _round_up(n, m):
    return (n + m - 1) // m * m


def actor_kernel(x_ref, w1_ref, b1_ref, w2d_ref, out_ref):
    tb = x_ref.shape[0]
    strip = STRIP if tb % STRIP == 0 else tb
    n_strips = tb // strip

    w1 = w1_ref[...]            # (NUM_STATE, HPAD)
    b1 = b1_ref[...]            # (1, HPAD); lane 127 holds 1.0 (bias lane)
    w2d = w2d_ref[...]          # (1, HPAD); lanes = w2[:,0]-w2[:,1], lane 127 = b2[0]-b2[1]

    def strip_body(s, carry):
        r0 = pl.multiple_of(s * strip, strip)
        x = x_ref[pl.ds(r0, strip), :]                    # (strip, NUM_STATE)

        # fc1 + relu: NUM_STATE broadcast multiply-adds on the VPU (unrolled at trace time).
        h = b1
        for k in range(NUM_STATE):
            h = h + x[:, k:k + 1] * w1[k:k + 1, :]
        h = jnp.maximum(h, 0.0)                           # (strip, HPAD); bias lane -> 1

        # action_head + 2-class softmax == sigmoid of the logit difference.
        d = jnp.sum(h * w2d, axis=1, keepdims=True)       # (strip, 1) = l0 - l1 (XLU reduce)
        t = jnp.tanh(0.5 * d)                             # EUP; sigmoid(d) = 0.5*(1+t)

        # Narrow (strip, 2) output block: p0 in column 0, p1 in column 1.
        out_ref[pl.ds(r0, strip), 0:1] = (0.5 + 0.5 * t).astype(out_ref.dtype)
        out_ref[pl.ds(r0, strip), 1:2] = (0.5 - 0.5 * t).astype(out_ref.dtype)
        return carry

    lax.fori_loop(0, n_strips, strip_body, 0, unroll=True)


def actor_forward(x, w1, b1, w2, b2, *, tile_b=TILE_B):
    """x: (B, 4) f32.  w1: (4, 100), b1: (100,), w2: (100, 2), b2: (2,)
    (weights stored as (in, out), i.e. already transposed vs PyTorch).
    Returns softmax action probabilities of shape (B, 2)."""
    batch = x.shape[0]

    # ---- one-time weight packing (plain XLA; fused/cached under jit) ----
    w1p = jnp.zeros((NUM_STATE, HPAD), jnp.float32).at[:, :HIDDEN].set(w1)
    b1p = jnp.zeros((1, HPAD), jnp.float32).at[0, :HIDDEN].set(b1)
    b1p = b1p.at[0, HPAD - 1].set(1.0)                        # constant-1 bias lane
    w2d = jnp.zeros((1, HPAD), jnp.float32).at[0, :HIDDEN].set(w2[:, 0] - w2[:, 1])
    w2d = w2d.at[0, HPAD - 1].set(b2[0] - b2[1])              # fc2 bias difference

    # ---- pick the batch tile ----
    # Cap at ceil(B/2) rows so the grid has >=2 steps whenever the batch allows
    # (v7x shards the "parallel" axis over its 2 TensorCores); keep it a multiple
    # of 8, and a multiple of STRIP once it exceeds one strip.
    half = _round_up(max(1, (batch + 1) // 2), 8)
    tb = max(8, min(tile_b, half))
    if tb > STRIP:
        tb = _round_up(tb, STRIP)
    padded = _round_up(batch, tb)
    xp = x if padded == batch else jnp.pad(x, ((0, padded - batch), (0, 0)))

    out = pl.pallas_call(
        actor_kernel,
        out_shape=jax.ShapeDtypeStruct((padded, NUM_ACTION), jnp.float32),
        grid=(padded // tb,),
        in_specs=[
            pl.BlockSpec((tb, NUM_STATE), lambda i: (i, 0)),
            pl.BlockSpec((NUM_STATE, HPAD), lambda i: (0, 0)),   # revisited, DMA'd once
            pl.BlockSpec((1, HPAD), lambda i: (0, 0)),
            pl.BlockSpec((1, HPAD), lambda i: (0, 0)),
        ],
        out_specs=pl.BlockSpec((tb, NUM_ACTION), lambda i: (i, 0)),
        compiler_params=pltpu.CompilerParams(
            dimension_semantics=("parallel",)),
    )(xp, w1p, b1p, w2d)

    return out[:batch]


def init_params(key):
    """Deterministic init mimicking nn.Linear defaults (uniform +/- 1/sqrt(fan_in))."""
    k1, k2, k3, k4 = jax.random.split(key, 4)
    bound1 = 1.0 / jnp.sqrt(NUM_STATE)
    bound2 = 1.0 / jnp.sqrt(HIDDEN)
    w1 = jax.random.uniform(k1, (NUM_STATE, HIDDEN), jnp.float32, -bound1, bound1)
    b1 = jax.random.uniform(k2, (HIDDEN,), jnp.float32, -bound1, bound1)
    w2 = jax.random.uniform(k3, (HIDDEN, NUM_ACTION), jnp.float32, -bound2, bound2)
    b2 = jax.random.uniform(k4, (NUM_ACTION,), jnp.float32, -bound2, bound2)
    return w1, b1, w2, b2


def _reference(x, w1, b1, w2, b2):
    h = jnp.maximum(x @ w1 + b1, 0.0)
    return jax.nn.softmax(h @ w2 + b2, axis=1)


if __name__ == "__main__":
    key = jax.random.PRNGKey(0)
    k_x, k_x2, k_x3, k_p = jax.random.split(key, 4)
    w1, b1, w2, b2 = init_params(k_p)

    # Small example (single grid step, single strip); jit amortizes weight packing.
    batch = 8
    x = jax.random.normal(k_x, (batch, NUM_STATE), jnp.float32)
    out = jax.block_until_ready(jax.jit(actor_forward)(x, w1, b1, w2, b2))
    ref = _reference(x, w1, b1, w2, b2)
    assert out.shape == (batch, NUM_ACTION)
    assert jnp.allclose(out, ref, atol=1e-5, rtol=1e-5)
    assert jnp.allclose(jnp.sum(out, axis=1), 1.0, atol=1e-5)

    # Batch not a tile multiple -> multi-step grid with a tiny tile.
    batch2 = 20
    x2 = jax.random.normal(k_x2, (batch2, NUM_STATE), jnp.float32)
    out2 = jax.block_until_ready(actor_forward(x2, w1, b1, w2, b2, tile_b=8))
    ref2 = _reference(x2, w1, b1, w2, b2)
    assert out2.shape == (batch2, NUM_ACTION)
    assert jnp.allclose(out2, ref2, atol=1e-5, rtol=1e-5)

    # Larger batch: exercises >=2 grid steps and the in-kernel 128-row strip loop.
    batch3 = 1024
    x3 = jax.random.normal(k_x3, (batch3, NUM_STATE), jnp.float32)
    out3 = jax.block_until_ready(actor_forward(x3, w1, b1, w2, b2))
    ref3 = _reference(x3, w1, b1, w2, b2)
    assert out3.shape == (batch3, NUM_ACTION)
    assert jnp.allclose(out3, ref3, atol=1e-5, rtol=1e-5)

    print("KERNEL_OK")
</pallas_src>

<mosaic_0001>
module attributes {stable_mosaic.version = 11 : i64} {
  func.func @actor_kernel(%arg0: i32, %arg1: memref<8x4xf32, #tpu.memory_space<vmem>>, %arg2: memref<4x128xf32, #tpu.memory_space<vmem>>, %arg3: memref<1x128xf32, #tpu.memory_space<vmem>>, %arg4: memref<1x128xf32, #tpu.memory_space<vmem>>, %arg5: memref<8x2xf32, #tpu.memory_space<vmem>>) attributes {dimension_semantics = [#tpu.dimension_semantics<parallel>], iteration_bounds = array<i64: 1>, scalar_prefetch = 0 : i64, scratch_operands = 0 : i64, tpu.core_type = #tpu.core_type<tc>, window_params = [{transform_indices = @transform_0, window_bounds = array<i64: 8, 4>}, {pipeline_mode = #tpu.pipeline_mode<synchronous>, transform_indices = @transform_1, window_bounds = array<i64: 4, 128>}, {pipeline_mode = #tpu.pipeline_mode<synchronous>, transform_indices = @transform_2, window_bounds = array<i64: 1, 128>}, {pipeline_mode = #tpu.pipeline_mode<synchronous>, transform_indices = @transform_3, window_bounds = array<i64: 1, 128>}, {transform_indices = @transform_4, window_bounds = array<i64: 8, 2>}]} {
    %c0 = arith.constant 0 : index
    %c0_0 = arith.constant 0 : index
    %0 = vector.load %arg2[%c0, %c0_0] : memref<4x128xf32, #tpu.memory_space<vmem>>, vector<4x128xf32>
    %c0_1 = arith.constant 0 : index
    %c0_2 = arith.constant 0 : index
    %1 = vector.load %arg3[%c0_1, %c0_2] : memref<1x128xf32, #tpu.memory_space<vmem>>, vector<1x128xf32>
    %c0_3 = arith.constant 0 : index
    %c0_4 = arith.constant 0 : index
    %2 = vector.load %arg4[%c0_3, %c0_4] : memref<1x128xf32, #tpu.memory_space<vmem>>, vector<1x128xf32>
    %c0_i32 = arith.constant 0 : i32
    %c8_i32 = arith.constant 8 : i32
    %3 = arith.muli %c0_i32, %c8_i32 : i32
    %4 = tpu.assume_multiple %3, 8 : i32
    %5 = arith.index_cast %4 : i32 to index
    %c0_5 = arith.constant 0 : index
    %6 = vector.load %arg1[%5, %c0_5] : memref<8x4xf32, #tpu.memory_space<vmem>>, vector<8x4xf32>
    %7 = vector.extract_strided_slice %6 {offsets = [0, 0], sizes = [8, 1], strides = [1, 1]} : vector<8x4xf32> to vector<8x1xf32>
    %8 = vector.extract_strided_slice %0 {offsets = [0, 0], sizes = [1, 128], strides = [1, 1]} : vector<4x128xf32> to vector<1x128xf32>
    %9 = vector.broadcast %7 : vector<8x1xf32> to vector<8x128xf32>
    %10 = vector.broadcast %8 : vector<1x128xf32> to vector<8x128xf32>
    %11 = arith.mulf %9, %10 : vector<8x128xf32>
    %12 = vector.broadcast %1 : vector<1x128xf32> to vector<8x128xf32>
    %13 = arith.addf %12, %11 : vector<8x128xf32>
    %14 = vector.extract_strided_slice %6 {offsets = [0, 1], sizes = [8, 1], strides = [1, 1]} : vector<8x4xf32> to vector<8x1xf32>
    %15 = vector.extract_strided_slice %0 {offsets = [1, 0], sizes = [1, 128], strides = [1, 1]} : vector<4x128xf32> to vector<1x128xf32>
    %16 = vector.broadcast %14 : vector<8x1xf32> to vector<8x128xf32>
    %17 = vector.broadcast %15 : vector<1x128xf32> to vector<8x128xf32>
    %18 = arith.mulf %16, %17 : vector<8x128xf32>
    %19 = arith.addf %13, %18 : vector<8x128xf32>
    %20 = vector.extract_strided_slice %6 {offsets = [0, 2], sizes = [8, 1], strides = [1, 1]} : vector<8x4xf32> to vector<8x1xf32>
    %21 = vector.extract_strided_slice %0 {offsets = [2, 0], sizes = [1, 128], strides = [1, 1]} : vector<4x128xf32> to vector<1x128xf32>
    %22 = vector.broadcast %20 : vector<8x1xf32> to vector<8x128xf32>
    %23 = vector.broadcast %21 : vector<1x128xf32> to vector<8x128xf32>
    %24 = arith.mulf %22, %23 : vector<8x128xf32>
    %25 = arith.addf %19, %24 : vector<8x128xf32>
    %26 = vector.extract_strided_slice %6 {offsets = [0, 3], sizes = [8, 1], strides = [1, 1]} : vector<8x4xf32> to vector<8x1xf32>
    %27 = vector.extract_strided_slice %0 {offsets = [3, 0], sizes = [1, 128], strides = [1, 1]} : vector<4x128xf32> to vector<1x128xf32>
    %28 = vector.broadcast %26 : vector<8x1xf32> to vector<8x128xf32>
    %29 = vector.broadcast %27 : vector<1x128xf32> to vector<8x128xf32>
    %30 = arith.mulf %28, %29 : vector<8x128xf32>
    %31 = arith.addf %25, %30 : vector<8x128xf32>
    %cst = arith.constant 0.000000e+00 : f32
    %32 = vector.broadcast %cst : f32 to vector<8x128xf32>
    %33 = arith.maximumf %31, %32 : vector<8x128xf32>
    %34 = vector.broadcast %2 : vector<1x128xf32> to vector<8x128xf32>
    %35 = arith.mulf %33, %34 : vector<8x128xf32>
    %cst_6 = arith.constant dense<0.000000e+00> : vector<8xf32>
    %36 = vector.multi_reduction <add>, %35, %cst_6 [1] : vector<8x128xf32> to vector<8xf32>
    %37 = vector.shape_cast %36 : vector<8xf32> to vector<8x1xf32>
    %cst_7 = arith.constant 5.000000e-01 : f32
    %38 = vector.broadcast %cst_7 : f32 to vector<8x1xf32>
    %39 = arith.mulf %38, %37 : vector<8x1xf32>
    %40 = math.tanh %39 : vector<8x1xf32>
    %cst_8 = arith.constant 5.000000e-01 : f32
    %41 = vector.broadcast %cst_8 : f32 to vector<8x1xf32>
    %42 = arith.mulf %41, %40 : vector<8x1xf32>
    %cst_9 = arith.constant 5.000000e-01 : f32
    %43 = vector.broadcast %cst_9 : f32 to vector<8x1xf32>
    %44 = arith.addf %43, %42 : vector<8x1xf32>
    %45 = arith.index_cast %4 : i32 to index
    %c0_10 = arith.constant 0 : index
    %46 = vector.load %arg5[%45, %c0_10] : memref<8x2xf32, #tpu.memory_space<vmem>>, vector<8x1xf32>
    tpu.vector_store %arg5[%45, %c0_10], %44 {strides = array<i32>} : memref<8x2xf32, #tpu.memory_space<vmem>>, vector<8x1xf32>,
    %cst_11 = arith.constant 5.000000e-01 : f32
    %47 = vector.broadcast %cst_11 : f32 to vector<8x1xf32>
    %48 = arith.mulf %47, %40 : vector<8x1xf32>
    %cst_12 = arith.constant 5.000000e-01 : f32
    %49 = vector.broadcast %cst_12 : f32 to vector<8x1xf32>
    %50 = arith.subf %49, %48 : vector<8x1xf32>
    %51 = arith.index_cast %4 : i32 to index
    %c1 = arith.constant 1 : index
    %52 = vector.load %arg5[%51, %c1] : memref<8x2xf32, #tpu.memory_space<vmem>>, vector<8x1xf32>
    tpu.vector_store %arg5[%51, %c1], %50 {strides = array<i32>} : memref<8x2xf32, #tpu.memory_space<vmem>>, vector<8x1xf32>,
    %c1_i32 = arith.constant 1 : i32
    return
  }
  func.func @transform_0(%arg0: i32) -> (i32, i32) {
    %c0_i32 = arith.constant 0 : i32
    %c0_i32_0 = arith.constant 0 : i32
    return %arg0, %c0_i32 : i32, i32
  }
  func.func @transform_1(%arg0: i32) -> (i32, i32) {
    %c0_i32 = arith.constant 0 : i32
    %c0_i32_0 = arith.constant 0 : i32
    %c0_i32_1 = arith.constant 0 : i32
    return %c0_i32, %c0_i32_0 : i32, i32
  }
  func.func @transform_2(%arg0: i32) -> (i32, i32) {
    %c0_i32 = arith.constant 0 : i32
    %c0_i32_0 = arith.constant 0 : i32
    %c0_i32_1 = arith.constant 0 : i32
    return %c0_i32, %c0_i32_0 : i32, i32
  }
  func.func @transform_3(%arg0: i32) -> (i32, i32) {
    %c0_i32 = arith.constant 0 : i32
    %c0_i32_0 = arith.constant 0 : i32
    %c0_i32_1 = arith.constant 0 : i32
    return %c0_i32, %c0_i32_0 : i32, i32
  }
  func.func @transform_4(%arg0: i32) -> (i32, i32) {
    %c0_i32 = arith.constant 0 : i32
    %c0_i32_0 = arith.constant 0 : i32
    return %arg0, %c0_i32 : i32, i32
  }
}

</mosaic_0001>

<llo_original>
// kernel: actor_forward.1
$region0: #{actor_forward.1}
  #allocation0 [shape = 'u32[]', space=smem, size = 0x4, offset = 0x4, fixed_abs, tag = 'smem constant byte address 0x4 - core index']
  #allocation1 [shape = 'u32[144,128]{1,0:T(1,128)}', space=vmem, size = 0x12000, scoped, tag = 'internal scratch']
  %s0 = inlined_call_operand.vmem [shape: f32[8,4], index: 0, kind: input, shape index: {}]
  %s1 = inlined_call_operand.vmem [shape: f32[4,128], index: 1, kind: input, shape index: {}]
  %s2 = inlined_call_operand.vmem [shape: f32[1,128], index: 2, kind: input, shape index: {}]
  %s3 = inlined_call_operand.vmem [shape: f32[1,128], index: 3, kind: input, shape index: {}]
  %s4 = inlined_call_operand.vmem [shape: f32[8,2], index: 4, kind: output, shape index: {}]
  %s5 = sld [smem:[#allocation0]]
  $region26: #{actor_forward.1} parent=0
    _
  %s7 = ssub.s32 1, %s5
  %s8 = scalar_select 0, %s7, %s5
  // Predicated region
  $region2: #{actor_forward.1} parent=0 // pred_check
    _
  $region3: #{actor_forward.1} parent=0 // pred_check_branch
    %10 = sbr.rel (0) target = $region5
  $region4: #{actor_forward.1} parent=0 // pred_region
    _
  $region5: #{actor_forward.1} parent=0 // pred_fallthru
    _
  // Predicated region
  $region6: #{actor_forward.1} parent=0 // pred_check
    _
  $region7: #{actor_forward.1} parent=0 // pred_check_branch
    %12 = sbr.rel (0) target = $region9
  $region8: #{actor_forward.1} parent=0 // pred_region
    _
  $region9: #{actor_forward.1} parent=0 // pred_fallthru
    _
  // Predicated region
  $region10: #{actor_forward.1} parent=0 // pred_check
    _
  $region11: #{actor_forward.1} parent=0 // pred_check_branch
    %14 = sbr.rel (0) target = $region13
  $region12: #{actor_forward.1} parent=0 // pred_region
    _
  $region13: #{actor_forward.1} parent=0 // pred_fallthru
    _
  // Predicated region
  $region14: #{actor_forward.1} parent=0 // pred_check
    _
  $region15: #{actor_forward.1} parent=0 // pred_check_branch
    %16 = sbr.rel (0) target = $region17
  $region16: #{actor_forward.1} parent=0 // pred_region
    _
  $region17: #{actor_forward.1} parent=0 // pred_fallthru
    _
  %v17 = vld [vmem:[%s1] sm:$0xf]
  %v18 = vld [vmem:[%s2] sm:$0x1]
  %v19 = vld [vmem:[%s3] sm:$0x1]
  %v20 = vld [vmem:[%s0] sm:$0xff]
  %22 = vset.pattern.permute.xlu0 0
  %23 = vperm.xlu0 %22, %v20
  %v24 = vpop.permute.xlu0 %23
  %v26 = vlaneseq
  %v27 = vshrl.u32 %v26, 7
  %v28 = vsub.s32 0, %v27
  %v29 = vrot.slane %v17, %v28
  %v30 = vmul.f32 %v24, %v29
  %v32 = vlaneseq
  %v33 = vshrl.u32 %v32, 7
  %v34 = vsub.s32 0, %v33
  %v35 = vrot.slane %v18, %v34
  %v37 = vadd.f32 %v35, %v30
  %38 = vset.pattern.permute.xlu0 1
  %39 = vperm.xlu0 %38, %v20
  %v40 = vpop.permute.xlu0 %39
  %v42 = vlaneseq
  %v43 = vshrl.u32 %v42, 7
  %v44 = vsub.s32 1, %v43
  %v45 = vrot.slane %v17, %v44
  %v46 = vmul.f32 %v40, %v45
  %v47 = vadd.f32 %v37, %v46
  %48 = vset.pattern.permute.xlu0 2
  %49 = vperm.xlu0 %48, %v20
  %v50 = vpop.permute.xlu0 %49
  %v52 = vlaneseq
  %v53 = vshrl.u32 %v52, 7
  %v54 = vsub.s32 2, %v53
  %v55 = vrot.slane %v17, %v54
  %v56 = vmul.f32 %v50, %v55
  %v57 = vadd.f32 %v47, %v56
  %58 = vset.pattern.permute.xlu0 3
  %59 = vperm.xlu0 %58, %v20
  %v60 = vpop.permute.xlu0 %59
  %v62 = vlaneseq
  %v63 = vshrl.u32 %v62, 7
  %v64 = vsub.s32 3, %v63
  %v65 = vrot.slane %v17, %v64
  %v66 = vmul.f32 %v60, %v65
  %v67 = vadd.f32 %v57, %v66
  %v68 = vmax.f32 %v67, 0.0
  %v70 = vlaneseq
  %v71 = vshrl.u32 %v70, 7
  %v72 = vsub.s32 0, %v71
  %v73 = vrot.slane %v19, %v72
  %v75 = vmul.f32 %v68, %v73
  %76 = vadd.xlane.f32.xlu0 %v75
  %v77 = vpop.xlane.xlu0 %76
  %v78 = vmul.f32 %v77, 0.5
  %v79 = vtanh.pop %v78
  %v80 = vmul.f32 %v79, 0.5
  %v81 = vadd.f32 %v80, 0.5
  %vm82 = vcmask 7168
  %83 = vst.msk [vmem:[%s4] sm:$0xff] %vm82, %v81
  %v84 = vsub.f32 0.5, %v80
  %vm85 = vcmask 15368
  %86 = vst.msk [vmem:[%s4] sm:$0xff] %vm85, %v84
  // Predicated region
  $region18: #{actor_forward.1} parent=0 // pred_check
    _
  $region19: #{actor_forward.1} parent=0 // pred_check_branch
    %88 = sbr.rel (0) target = $region21
  $region20: #{actor_forward.1} parent=0 // pred_region
    _
  $region21: #{actor_forward.1} parent=0 // pred_fallthru
    _
  // Predicated region
  $region22: #{actor_forward.1} parent=0 // pred_check
    _
  $region23: #{actor_forward.1} parent=0 // pred_check_branch
    %90 = sbr.rel (0) target = $region25
  $region24: #{actor_forward.1} parent=0 // pred_region
    _
  $region25: #{actor_forward.1} parent=0 // pred_fallthru
    _

</llo_original>
